<compile_context>
chip_gen: v7x
topology: tpu7x:2x2x1
jax: 0.10.0
libtpu: 0.0.40
codegen_flags: <defaults>
</compile_context>

<pallas_src>
import functools

import jax
import jax.numpy as jnp
from jax.experimental import pallas as pl
from jax.experimental.pallas import tpu as pltpu


def _round_up(x, m):
    return (x + m - 1) // m * m


def _multihead_kernel(x_ref, wbb_ref, bbb_ref, w1_ref, b1_ref, w2_ref, b2_ref,
                      feat_ref, logits_ref):
    # Per grid step:
    #   x_ref:      [TB, In_p]     bf16
    #   wbb_ref:    [In_p, Dp]     bf16    bbb_ref: [1, Dp]       f32
    #   w1_ref:     [Dp, 2*Dp]     bf16    b1_ref:  [1, 2*Dp]     f32   (wf1 | wc1)
    #   w2_ref:     [2*Dp, Fp+Cp]  bf16    b2_ref:  [1, Fp+Cp]    f32   (block-diag wf2/wc2)
    #   feat_ref:   [TB, Fp]       f32 out (L2-normalized along lanes)
    #   logits_ref: [TB, Cp]       f32 out
    fp = feat_ref.shape[1]

    # Backbone: Linear + ReLU (bf16 MXU operands, f32 accumulation & elementwise).
    h = jnp.dot(x_ref[...], wbb_ref[...], preferred_element_type=jnp.float32)
    h = jnp.maximum(h + bbb_ref[...], 0.0)

    # Fused head layer 1: [feature-hidden | classifier-hidden], Linear + ReLU.
    h1 = jnp.dot(h.astype(jnp.bfloat16), w1_ref[...],
                 preferred_element_type=jnp.float32)
    h1 = jnp.maximum(h1 + b1_ref[...], 0.0)

    # Fused head layer 2 (block-diagonal weight keeps the two heads independent).
    y = jnp.dot(h1.astype(jnp.bfloat16), w2_ref[...],
                preferred_element_type=jnp.float32)
    y = y + b2_ref[...]

    feat = y[:, :fp]       # 128-aligned lane slice
    logits = y[:, fp:]

    # F.normalize(dim=1): x / max(||x||, 1e-12) == x * rsqrt(max(||x||^2, 1e-24)).
    # Padded feature lanes are exactly zero, so summing over Fp lanes == real sum.
    sq = jnp.sum(feat * feat, axis=1, keepdims=True)
    feat = feat * jax.lax.rsqrt(jnp.maximum(sq, 1e-24))

    feat_ref[...] = feat.astype(feat_ref.dtype)
    logits_ref[...] = logits.astype(logits_ref.dtype)


def pack_params(params, in_dim, backbone_dim, features_dim, n_classes):
    """Pad to 128-multiples, fuse the head weights, cast matmul weights to bf16."""
    (wbb, bbb, wf1, bf1, wf2, bf2, wc1, bc1, wc2, bc2) = params
    in_p = _round_up(in_dim, 128)
    dp = _round_up(backbone_dim, 128)
    fp = _round_up(features_dim, 128)
    cp = _round_up(n_classes, 128)

    wbb_p = jnp.zeros((in_p, dp), jnp.float32).at[:in_dim, :backbone_dim].set(wbb)
    bbb_p = jnp.zeros((1, dp), jnp.float32).at[:, :backbone_dim].set(bbb)

    w1_p = (jnp.zeros((dp, 2 * dp), jnp.float32)
            .at[:backbone_dim, :backbone_dim].set(wf1)
            .at[:backbone_dim, dp:dp + backbone_dim].set(wc1))
    b1_p = (jnp.zeros((1, 2 * dp), jnp.float32)
            .at[:, :backbone_dim].set(bf1)
            .at[:, dp:dp + backbone_dim].set(bc1))

    w2_p = (jnp.zeros((2 * dp, fp + cp), jnp.float32)
            .at[:backbone_dim, :features_dim].set(wf2)
            .at[dp:dp + backbone_dim, fp:fp + n_classes].set(wc2))
    b2_p = (jnp.zeros((1, fp + cp), jnp.float32)
            .at[:, :features_dim].set(bf2)
            .at[:, fp:fp + n_classes].set(bc2))

    return (wbb_p.astype(jnp.bfloat16), bbb_p,
            w1_p.astype(jnp.bfloat16), b1_p,
            w2_p.astype(jnp.bfloat16), b2_p)


@functools.partial(jax.jit, static_argnames=("features_dim", "n_classes"))
def multihead_forward(x_nchw, packed, *, features_dim, n_classes):
    """x_nchw: [B, C, H, W] f32. Returns (features [B, F] L2-normalized, logits [B, n_classes])."""
    B = x_nchw.shape[0]
    wbb_p, bbb_p, w1_p, b1_p, w2_p, b2_p = packed
    in_p, dp = wbb_p.shape
    fp = _round_up(features_dim, 128)
    cp = w2_p.shape[1] - fp

    x_flat = x_nchw.reshape(B, -1)          # same as torch .view(B, -1)
    in_dim = x_flat.shape[1]

    # Batch tile: sublane-aligned, capped at 256 rows; pad batch to a multiple.
    tb = min(256, _round_up(B, 8))
    bp = _round_up(B, tb)
    x_p = jnp.zeros((bp, in_p), jnp.bfloat16).at[:B, :in_dim].set(
        x_flat.astype(jnp.bfloat16))

    grid = (bp // tb,)
    const = lambda i: (0, 0)

    in_specs = [
        pl.BlockSpec((tb, in_p), lambda i: (i, 0)),   # x: tiled over batch
        pl.BlockSpec(wbb_p.shape, const),             # weights: VMEM-resident
        pl.BlockSpec(bbb_p.shape, const),
        pl.BlockSpec(w1_p.shape, const),
        pl.BlockSpec(b1_p.shape, const),
        pl.BlockSpec(w2_p.shape, const),
        pl.BlockSpec(b2_p.shape, const),
    ]
    out_specs = (
        pl.BlockSpec((tb, fp), lambda i: (i, 0)),
        pl.BlockSpec((tb, cp), lambda i: (i, 0)),
    )

    # VMEM budget: 2x-buffered x tile + resident weights + 2x-buffered outputs
    # + f32 intermediates.  Clamp to [32 MiB, 64 MiB] (v7x physical = 64 MiB).
    vmem_need = (
        2 * tb * in_p * 2
        + (wbb_p.size + w1_p.size + w2_p.size) * 2
        + (bbb_p.size + b1_p.size + b2_p.size) * 4
        + 2 * tb * (fp + cp) * 4
        + tb * (dp + 2 * dp + fp + cp) * 4
    )
    vmem_limit = min(max(2 * vmem_need + (4 << 20), 32 << 20), 64 << 20)

    feat_p, logits_p = pl.pallas_call(
        _multihead_kernel,
        out_shape=(
            jax.ShapeDtypeStruct((bp, fp), jnp.float32),
            jax.ShapeDtypeStruct((bp, cp), jnp.float32),
        ),
        grid=grid,
        in_specs=in_specs,
        out_specs=out_specs,
        compiler_params=pltpu.CompilerParams(
            dimension_semantics=("parallel",),
            vmem_limit_bytes=vmem_limit,
        ),
    )(x_p, wbb_p, bbb_p, w1_p, b1_p, w2_p, b2_p)

    return feat_p[:B, :features_dim], logits_p[:B, :n_classes]


def init_params(key, in_dim, backbone_dim, features_dim, n_classes):
    """Torch-Linear-style init; weights stored as [in, out], biases as [1, out]."""
    def linear(k, fan_in, fan_out):
        kw, kb = jax.random.split(k)
        bound = 1.0 / jnp.sqrt(jnp.float32(fan_in))
        w = jax.random.uniform(kw, (fan_in, fan_out), jnp.float32, -bound, bound)
        b = jax.random.uniform(kb, (1, fan_out), jnp.float32, -bound, bound)
        return w, b

    keys = jax.random.split(key, 5)
    wbb, bbb = linear(keys[0], in_dim, backbone_dim)          # backbone Linear
    wf1, bf1 = linear(keys[1], backbone_dim, backbone_dim)    # feature head L1
    wf2, bf2 = linear(keys[2], backbone_dim, features_dim)    # feature head L2
    wc1, bc1 = linear(keys[3], backbone_dim, backbone_dim)    # classifier head L1
    wc2, bc2 = linear(keys[4], backbone_dim, n_classes)       # classifier head L2
    return (wbb, bbb, wf1, bf1, wf2, bf2, wc1, bc1, wc2, bc2)


def _reference_forward(x_nchw, params):
    """Pure-JAX f32 reference matching the PyTorch module's forward."""
    (wbb, bbb, wf1, bf1, wf2, bf2, wc1, bc1, wc2, bc2) = params
    B = x_nchw.shape[0]
    x = x_nchw.reshape(B, -1)
    h = jnp.maximum(x @ wbb + bbb, 0.0)
    c = jnp.maximum(h @ wc1 + bc1, 0.0)
    logits = c @ wc2 + bc2
    f = jnp.maximum(h @ wf1 + bf1, 0.0)
    feat = f @ wf2 + bf2
    norm = jnp.linalg.norm(feat, axis=1, keepdims=True)
    feat = feat / jnp.maximum(norm, 1e-12)
    return feat, logits


if __name__ == "__main__":
    # Small shapes consistent with the module's forward.
    B, C, H, W = 2, 4, 16, 16
    backbone_dim = 32
    features_dim = 16
    n_classes = 10
    in_dim = C * H * W

    key = jax.random.PRNGKey(0)
    kx, kp = jax.random.split(key)
    x = jax.random.normal(kx, (B, C, H, W), dtype=jnp.float32)
    params = init_params(kp, in_dim, backbone_dim, features_dim, n_classes)
    packed = pack_params(params, in_dim, backbone_dim, features_dim, n_classes)

    feats, logits = multihead_forward(
        x, packed, features_dim=features_dim, n_classes=n_classes)
    jax.block_until_ready((feats, logits))

    # Sanity: shapes, unit-norm features, and agreement with an f32 reference
    # (loose tolerances account for bf16 matmul operands).
    assert feats.shape == (B, features_dim)
    assert logits.shape == (B, n_classes)
    norms = jnp.linalg.norm(feats, axis=1)
    assert jnp.allclose(norms, 1.0, atol=1e-4), norms

    ref_feats, ref_logits = _reference_forward(x, params)
    assert jnp.allclose(feats, ref_feats, rtol=5e-2, atol=2e-2)
    assert jnp.allclose(logits, ref_logits, rtol=5e-2, atol=2e-2)

    print("KERNEL_OK")
</pallas_src>

<mosaic_0001>
module attributes {stable_mosaic.version = 11 : i64} {
  func.func @_multihead_kernel(%arg0: i32, %arg1: memref<8x1024xbf16, #tpu.memory_space<vmem>>, %arg2: memref<1024x128xbf16, #tpu.memory_space<vmem>>, %arg3: memref<1x128xf32, #tpu.memory_space<vmem>>, %arg4: memref<128x256xbf16, #tpu.memory_space<vmem>>, %arg5: memref<1x256xf32, #tpu.memory_space<vmem>>, %arg6: memref<256x256xbf16, #tpu.memory_space<vmem>>, %arg7: memref<1x256xf32, #tpu.memory_space<vmem>>, %arg8: memref<8x128xf32, #tpu.memory_space<vmem>>, %arg9: memref<8x128xf32, #tpu.memory_space<vmem>>) attributes {dimension_semantics = [#tpu.dimension_semantics<parallel>], iteration_bounds = array<i64: 1>, scalar_prefetch = 0 : i64, scratch_operands = 0 : i64, tpu.core_type = #tpu.core_type<tc>, window_params = [{transform_indices = @transform_0, window_bounds = array<i64: 8, 1024>}, {pipeline_mode = #tpu.pipeline_mode<synchronous>, transform_indices = @transform_1, window_bounds = array<i64: 1024, 128>}, {pipeline_mode = #tpu.pipeline_mode<synchronous>, transform_indices = @transform_2, window_bounds = array<i64: 1, 128>}, {pipeline_mode = #tpu.pipeline_mode<synchronous>, transform_indices = @transform_3, window_bounds = array<i64: 128, 256>}, {pipeline_mode = #tpu.pipeline_mode<synchronous>, transform_indices = @transform_4, window_bounds = array<i64: 1, 256>}, {pipeline_mode = #tpu.pipeline_mode<synchronous>, transform_indices = @transform_5, window_bounds = array<i64: 256, 256>}, {pipeline_mode = #tpu.pipeline_mode<synchronous>, transform_indices = @transform_6, window_bounds = array<i64: 1, 256>}, {transform_indices = @transform_7, window_bounds = array<i64: 8, 128>}, {transform_indices = @transform_8, window_bounds = array<i64: 8, 128>}]} {
    %c0 = arith.constant 0 : index
    %c0_0 = arith.constant 0 : index
    %0 = vector.load %arg1[%c0, %c0_0] : memref<8x1024xbf16, #tpu.memory_space<vmem>>, vector<8x1024xbf16>
    %c0_1 = arith.constant 0 : index
    %c0_2 = arith.constant 0 : index
    %1 = vector.load %arg2[%c0_1, %c0_2] : memref<1024x128xbf16, #tpu.memory_space<vmem>>, vector<1024x128xbf16>
    %cst = arith.constant dense<0.000000e+00> : vector<8x128xf32>
    %2 = tpu.matmul %0, %1, %cst {dimension_numbers = #tpu.dot_dimension_numbers<[1], [0], [0], [1], [0, 0, 1, 1], [], []>} : vector<8x1024xbf16>, vector<1024x128xbf16>, vector<8x128xf32> -> vector<8x128xf32>
    %c0_3 = arith.constant 0 : index
    %c0_4 = arith.constant 0 : index
    %3 = vector.load %arg3[%c0_3, %c0_4] : memref<1x128xf32, #tpu.memory_space<vmem>>, vector<1x128xf32>
    %4 = vector.broadcast %3 : vector<1x128xf32> to vector<8x128xf32>
    %5 = arith.addf %2, %4 : vector<8x128xf32>
    %cst_5 = arith.constant 0.000000e+00 : f32
    %6 = vector.broadcast %cst_5 : f32 to vector<8x128xf32>
    %7 = arith.maximumf %5, %6 : vector<8x128xf32>
    %8 = arith.truncf %7 : vector<8x128xf32> to vector<8x128xbf16>
    %c0_6 = arith.constant 0 : index
    %c0_7 = arith.constant 0 : index
    %9 = vector.load %arg4[%c0_6, %c0_7] : memref<128x256xbf16, #tpu.memory_space<vmem>>, vector<128x256xbf16>
    %cst_8 = arith.constant dense<0.000000e+00> : vector<8x256xf32>
    %10 = tpu.matmul %8, %9, %cst_8 {dimension_numbers = #tpu.dot_dimension_numbers<[1], [0], [0], [1], [0, 0, 1, 1], [], []>} : vector<8x128xbf16>, vector<128x256xbf16>, vector<8x256xf32> -> vector<8x256xf32>
    %c0_9 = arith.constant 0 : index
    %c0_10 = arith.constant 0 : index
    %11 = vector.load %arg5[%c0_9, %c0_10] : memref<1x256xf32, #tpu.memory_space<vmem>>, vector<1x256xf32>
    %12 = vector.broadcast %11 : vector<1x256xf32> to vector<8x256xf32>
    %13 = arith.addf %10, %12 : vector<8x256xf32>
    %cst_11 = arith.constant 0.000000e+00 : f32
    %14 = vector.broadcast %cst_11 : f32 to vector<8x256xf32>
    %15 = arith.maximumf %13, %14 : vector<8x256xf32>
    %16 = arith.truncf %15 : vector<8x256xf32> to vector<8x256xbf16>
    %c0_12 = arith.constant 0 : index
    %c0_13 = arith.constant 0 : index
    %17 = vector.load %arg6[%c0_12, %c0_13] : memref<256x256xbf16, #tpu.memory_space<vmem>>, vector<256x256xbf16>
    %cst_14 = arith.constant dense<0.000000e+00> : vector<8x256xf32>
    %18 = tpu.matmul %16, %17, %cst_14 {dimension_numbers = #tpu.dot_dimension_numbers<[1], [0], [0], [1], [0, 0, 1, 1], [], []>} : vector<8x256xbf16>, vector<256x256xbf16>, vector<8x256xf32> -> vector<8x256xf32>
    %c0_15 = arith.constant 0 : index
    %c0_16 = arith.constant 0 : index
    %19 = vector.load %arg7[%c0_15, %c0_16] : memref<1x256xf32, #tpu.memory_space<vmem>>, vector<1x256xf32>
    %20 = vector.broadcast %19 : vector<1x256xf32> to vector<8x256xf32>
    %21 = arith.addf %18, %20 : vector<8x256xf32>
    %22 = vector.extract_strided_slice %21 {offsets = [0, 0], sizes = [8, 128], strides = [1, 1]} : vector<8x256xf32> to vector<8x128xf32>
    %23 = vector.extract_strided_slice %21 {offsets = [0, 128], sizes = [8, 128], strides = [1, 1]} : vector<8x256xf32> to vector<8x128xf32>
    %24 = arith.mulf %22, %22 : vector<8x128xf32>
    %cst_17 = arith.constant dense<0.000000e+00> : vector<8xf32>
    %25 = vector.multi_reduction <add>, %24, %cst_17 [1] : vector<8x128xf32> to vector<8xf32>
    %26 = vector.shape_cast %25 : vector<8xf32> to vector<8x1xf32>
    %cst_18 = arith.constant 1.000000e-24 : f32
    %27 = vector.broadcast %cst_18 : f32 to vector<8x1xf32>
    %28 = arith.maximumf %26, %27 : vector<8x1xf32>
    %29 = math.rsqrt %28 : vector<8x1xf32>
    %30 = vector.broadcast %29 : vector<8x1xf32> to vector<8x128xf32>
    %31 = arith.mulf %22, %30 : vector<8x128xf32>
    %c0_19 = arith.constant 0 : index
    %c0_20 = arith.constant 0 : index
    %32 = vector.load %arg8[%c0_19, %c0_20] : memref<8x128xf32, #tpu.memory_space<vmem>>, vector<8x128xf32>
    tpu.vector_store %arg8[%c0_19, %c0_20], %31 {strides = array<i32>} : memref<8x128xf32, #tpu.memory_space<vmem>>, vector<8x128xf32>,
    %c0_21 = arith.constant 0 : index
    %c0_22 = arith.constant 0 : index
    %33 = vector.load %arg9[%c0_21, %c0_22] : memref<8x128xf32, #tpu.memory_space<vmem>>, vector<8x128xf32>
    tpu.vector_store %arg9[%c0_21, %c0_22], %23 {strides = array<i32>} : memref<8x128xf32, #tpu.memory_space<vmem>>, vector<8x128xf32>,
    return
  }
  func.func @transform_0(%arg0: i32) -> (i32, i32) {
    %c0_i32 = arith.constant 0 : i32
    %c0_i32_0 = arith.constant 0 : i32
    return %arg0, %c0_i32 : i32, i32
  }
  func.func @transform_1(%arg0: i32) -> (i32, i32) {
    %c0_i32 = arith.constant 0 : i32
    %c0_i32_0 = arith.constant 0 : i32
    %c0_i32_1 = arith.constant 0 : i32
    return %c0_i32, %c0_i32_0 : i32, i32
  }
  func.func @transform_2(%arg0: i32) -> (i32, i32) {
    %c0_i32 = arith.constant 0 : i32
    %c0_i32_0 = arith.constant 0 : i32
    %c0_i32_1 = arith.constant 0 : i32
    return %c0_i32, %c0_i32_0 : i32, i32
  }
  func.func @transform_3(%arg0: i32) -> (i32, i32) {
    %c0_i32 = arith.constant 0 : i32
    %c0_i32_0 = arith.constant 0 : i32
    %c0_i32_1 = arith.constant 0 : i32
    return %c0_i32, %c0_i32_0 : i32, i32
  }
  func.func @transform_4(%arg0: i32) -> (i32, i32) {
    %c0_i32 = arith.constant 0 : i32
    %c0_i32_0 = arith.constant 0 : i32
    %c0_i32_1 = arith.constant 0 : i32
    return %c0_i32, %c0_i32_0 : i32, i32
  }
  func.func @transform_5(%arg0: i32) -> (i32, i32) {
    %c0_i32 = arith.constant 0 : i32
    %c0_i32_0 = arith.constant 0 : i32
    %c0_i32_1 = arith.constant 0 : i32
    return %c0_i32, %c0_i32_0 : i32, i32
  }
  func.func @transform_6(%arg0: i32) -> (i32, i32) {
    %c0_i32 = arith.constant 0 : i32
    %c0_i32_0 = arith.constant 0 : i32
    %c0_i32_1 = arith.constant 0 : i32
    return %c0_i32, %c0_i32_0 : i32, i32
  }
  func.func @transform_7(%arg0: i32) -> (i32, i32) {
    %c0_i32 = arith.constant 0 : i32
    %c0_i32_0 = arith.constant 0 : i32
    return %arg0, %c0_i32 : i32, i32
  }
  func.func @transform_8(%arg0: i32) -> (i32, i32) {
    %c0_i32 = arith.constant 0 : i32
    %c0_i32_0 = arith.constant 0 : i32
    return %arg0, %c0_i32 : i32, i32
  }
}

</mosaic_0001>

<llo_original>
// kernel: multihead_forward.1
$region0: #{multihead_forward.1}
  #allocation0 [shape = 'u32[]', space=smem, size = 0x4, offset = 0x4, fixed_abs, tag = 'smem constant byte address 0x4 - core index']
  #allocation1 [shape = 'u32[144,128]{1,0:T(1,128)}', space=vmem, size = 0x12000, scoped, tag = 'internal scratch']
  %s0 = inlined_call_operand.vmem [shape: bf16[8,1024], index: 0, kind: input, shape index: {}]
  %s1 = inlined_call_operand.hbm [shape: bf16[1024,128], index: 1, kind: input, shape index: {}]
  %s2 = inlined_call_operand.vmem [shape: f32[1,128], index: 2, kind: input, shape index: {}]
  %s3 = inlined_call_operand.hbm [shape: bf16[128,256], index: 3, kind: input, shape index: {}]
  %s4 = inlined_call_operand.vmem [shape: f32[1,256], index: 4, kind: input, shape index: {}]
  %s5 = inlined_call_operand.vmem [shape: bf16[256,256], index: 5, kind: input, shape index: {}]
  %s6 = inlined_call_operand.vmem [shape: f32[1,256], index: 6, kind: input, shape index: {}]
  %s7 = inlined_call_operand.vmem [shape: f32[8,128], index: 7, kind: output, shape index: {0}]
  %s8 = inlined_call_operand.vmem [shape: f32[8,128], index: 8, kind: output, shape index: {1}]
  %9 = xla_tuple %s7, %s8
  %s10 = sld [smem:[#allocation0]]
  $region54: #{multihead_forward.1} parent=0
    _
  %s12 = ssub.s32 1, %s10
  %s13 = scalar_select 0, %s12, %s10
  $region1: #{multihead_forward.1} parent=0
    #allocation2 [shape = 'u8[262144]{0}', space=vmem, size = 0x40000, scoped, tag = 'input window, operand 1, single buffered']
    #allocation3 [shape = 's32[1]{0}', space=sflag, size = 0x4, scoped, tag = 'scoped memory for multihead_forward.1']
    #allocation4 [shape = 'u8[65536]{0}', space=vmem, size = 0x10000, scoped, tag = 'input window, operand 3, single buffered']
    #allocation5 [shape = 's32[1]{0}', space=sflag, size = 0x4, scoped, tag = 'scoped memory for multihead_forward.1']
    %14 = vsyncpa [#allocation3], 0
    %15 = vsyncpa [#allocation5], 0
    // Predicated region
    $region2: #{multihead_forward.1} parent=1 // pred_check
      _
    $region3: #{multihead_forward.1} parent=1 // pred_check_branch
      %17 = sbr.rel (0) target = $region5
    $region4: #{multihead_forward.1} parent=1 // pred_region
      _
    $region5: #{multihead_forward.1} parent=1 // pred_fallthru
      _
    // Predicated region
    $region6: #{multihead_forward.1} parent=1 // pred_check
      _
    $region7: #{multihead_forward.1} parent=1 // pred_check_branch
      %19 = sbr.rel (0) target = $region9
    $region8: #{multihead_forward.1} parent=1 // pred_region
      %s21 = ssub.s32 8192, 8192
      %22 = vsyncadd [#allocation3], %s21
      %s23 = sshll.u32 [#allocation2], 4
      %s24 = int_to_ptr.vmem [resolvable:$true] %s23
      %29 = dma.hbm_to_vmem [thread:$0]  %s1, 8192, %s24, [#allocation3], 64, 64, 4
    $region9: #{multihead_forward.1} parent=1 // pred_fallthru
      _
    // Predicated region
    $region10: #{multihead_forward.1} parent=1 // pred_check
      _
    $region11: #{multihead_forward.1} parent=1 // pred_check_branch
      %31 = sbr.rel (0) target = $region13
    $region12: #{multihead_forward.1} parent=1 // pred_region
      _
    $region13: #{multihead_forward.1} parent=1 // pred_fallthru
      _
    // Predicated region
    $region14: #{multihead_forward.1} parent=1 // pred_check
      _
    $region15: #{multihead_forward.1} parent=1 // pred_check_branch
      %33 = sbr.rel (0) target = $region17
    $region16: #{multihead_forward.1} parent=1 // pred_region
      %s35 = ssub.s32 2048, 2048
      %36 = vsyncadd [#allocation5], %s35
      %s37 = sshll.u32 [#allocation4], 4
      %s38 = int_to_ptr.vmem [resolvable:$true] %s37
      %43 = dma.hbm_to_vmem [thread:$0]  %s3, 2048, %s38, [#allocation5], 128, 128, 8
    $region17: #{multihead_forward.1} parent=1 // pred_fallthru
      _
    // Predicated region
    $region18: #{multihead_forward.1} parent=1 // pred_check
      _
    $region19: #{multihead_forward.1} parent=1 // pred_check_branch
      %45 = sbr.rel (0) target = $region21
    $region20: #{multihead_forward.1} parent=1 // pred_region
      _
    $region21: #{multihead_forward.1} parent=1 // pred_fallthru
      _
    // Predicated region
    $region22: #{multihead_forward.1} parent=1 // pred_check
      _
    $region23: #{multihead_forward.1} parent=1 // pred_check_branch
      %47 = sbr.rel (0) target = $region25
    $region24: #{multihead_forward.1} parent=1 // pred_region
      _
    $region25: #{multihead_forward.1} parent=1 // pred_fallthru
      _
    // Predicated region
    $region26: #{multihead_forward.1} parent=1 // pred_check
      _
    $region27: #{multihead_forward.1} parent=1 // pred_check_branch
      %49 = sbr.rel (0) target = $region29
    $region28: #{multihead_forward.1} parent=1 // pred_region
      _
    $region29: #{multihead_forward.1} parent=1 // pred_fallthru
      _
    // Predicated region
    $region30: #{multihead_forward.1} parent=1 // pred_check
      _
    $region31: #{multihead_forward.1} parent=1 // pred_check_branch
      %51 = sbr.rel (0) target = $region33
    $region32: #{multihead_forward.1} parent=1 // pred_region
      %52 = dma.done [#allocation3], 8192
    $region33: #{multihead_forward.1} parent=1 // pred_fallthru
      _
    // Predicated region
    $region34: #{multihead_forward.1} parent=1 // pred_check
      _
    $region35: #{multihead_forward.1} parent=1 // pred_check_branch
      %54 = sbr.rel (0) target = $region37
    $region36: #{multihead_forward.1} parent=1 // pred_region
      %55 = dma.done [#allocation5], 2048
    $region37: #{multihead_forward.1} parent=1 // pred_fallthru
      _
    %v57 = vld [vmem:[%s0] sm:$0xff]
    %v58 = vld [vmem:[%s0 + $0x8] sm:$0xff]
    %v59 = vld [vmem:[%s0 + $0x10] sm:$0xff]
    %v60 = vld [vmem:[%s0 + $0x18] sm:$0xff]
    %v61 = vld [vmem:[#allocation2] sm:$0xf]
    %v62 = vld [vmem:[#allocation2 + $0x4] sm:$0xf]
    %v63 = vld [vmem:[#allocation2 + $0x8] sm:$0xf]
    %v64 = vld [vmem:[#allocation2 + $0xc] sm:$0xf]
    %v65 = vld [vmem:[#allocation2 + $0x10] sm:$0xf]
    %v66 = vld [vmem:[#allocation2 + $0x14] sm:$0xf]
    %v67 = vld [vmem:[#allocation2 + $0x18] sm:$0xf]
    %v68 = vld [vmem:[#allocation2 + $0x1c] sm:$0xf]
    %v69 = vld [vmem:[#allocation2 + $0x20] sm:$0xf]
    %v70 = vld [vmem:[#allocation2 + $0x24] sm:$0xf]
    %v71 = vld [vmem:[#allocation2 + $0x28] sm:$0xf]
    %v72 = vld [vmem:[#allocation2 + $0x2c] sm:$0xf]
    %v73 = vld [vmem:[#allocation2 + $0x30] sm:$0xf]
    %v74 = vld [vmem:[#allocation2 + $0x34] sm:$0xf]
    %v75 = vld [vmem:[#allocation2 + $0x38] sm:$0xf]
    %v76 = vld [vmem:[#allocation2 + $0x3c] sm:$0xf]
    %v77 = vld [vmem:[#allocation2 + $0x40] sm:$0xf]
    %v78 = vld [vmem:[#allocation2 + $0x44] sm:$0xf]
    %v79 = vld [vmem:[#allocation2 + $0x48] sm:$0xf]
    %v80 = vld [vmem:[#allocation2 + $0x4c] sm:$0xf]
    %v81 = vld [vmem:[#allocation2 + $0x50] sm:$0xf]
    %v82 = vld [vmem:[#allocation2 + $0x54] sm:$0xf]
    %v83 = vld [vmem:[#allocation2 + $0x58] sm:$0xf]
    %v84 = vld [vmem:[#allocation2 + $0x5c] sm:$0xf]
    %v85 = vld [vmem:[#allocation2 + $0x60] sm:$0xf]
    %v86 = vld [vmem:[#allocation2 + $0x64] sm:$0xf]
    %v87 = vld [vmem:[#allocation2 + $0x68] sm:$0xf]
    %v88 = vld [vmem:[#allocation2 + $0x6c] sm:$0xf]
    %v89 = vld [vmem:[#allocation2 + $0x70] sm:$0xf]
    %v90 = vld [vmem:[#allocation2 + $0x74] sm:$0xf]
    %v91 = vld [vmem:[#allocation2 + $0x78] sm:$0xf]
    %v92 = vld [vmem:[#allocation2 + $0x7c] sm:$0xf]
    %v93 = vld [vmem:[#allocation2 + $0x80] sm:$0xf]
    %v94 = vld [vmem:[#allocation2 + $0x84] sm:$0xf]
    %v95 = vld [vmem:[#allocation2 + $0x88] sm:$0xf]
    %v96 = vld [vmem:[#allocation2 + $0x8c] sm:$0xf]
    %v97 = vld [vmem:[#allocation2 + $0x90] sm:$0xf]
    %v98 = vld [vmem:[#allocation2 + $0x94] sm:$0xf]
    %v99 = vld [vmem:[#allocation2 + $0x98] sm:$0xf]
    %v100 = vld [vmem:[#allocation2 + $0x9c] sm:$0xf]
    %v101 = vld [vmem:[#allocation2 + $0xa0] sm:$0xf]
    %v102 = vld [vmem:[#allocation2 + $0xa4] sm:$0xf]
    %v103 = vld [vmem:[#allocation2 + $0xa8] sm:$0xf]
    %v104 = vld [vmem:[#allocation2 + $0xac] sm:$0xf]
    %v105 = vld [vmem:[#allocation2 + $0xb0] sm:$0xf]
    %v106 = vld [vmem:[#allocation2 + $0xb4] sm:$0xf]
    %v107 = vld [vmem:[#allocation2 + $0xb8] sm:$0xf]
    %v108 = vld [vmem:[#allocation2 + $0xbc] sm:$0xf]
    %v109 = vld [vmem:[#allocation2 + $0xc0] sm:$0xf]
    %v110 = vld [vmem:[#allocation2 + $0xc4] sm:$0xf]
    %v111 = vld [vmem:[#allocation2 + $0xc8] sm:$0xf]
    %v112 = vld [vmem:[#allocation2 + $0xcc] sm:$0xf]
    %v113 = vld [vmem:[#allocation2 + $0xd0] sm:$0xf]
    %v114 = vld [vmem:[#allocation2 + $0xd4] sm:$0xf]
    %v115 = vld [vmem:[#allocation2 + $0xd8] sm:$0xf]
    %v116 = vld [vmem:[#allocation2 + $0xdc] sm:$0xf]
    %v117 = vld [vmem:[#allocation2 + $0xe0] sm:$0xf]
    %v118 = vld [vmem:[#allocation2 + $0xe4] sm:$0xf]
    %v119 = vld [vmem:[#allocation2 + $0xe8] sm:$0xf]
    %v120 = vld [vmem:[#allocation2 + $0xec] sm:$0xf]
    %v121 = vld [vmem:[#allocation2 + $0xf0] sm:$0xf]
    %v122 = vld [vmem:[#allocation2 + $0xf4] sm:$0xf]
    %v123 = vld [vmem:[#allocation2 + $0xf8] sm:$0xf]
    %v124 = vld [vmem:[#allocation2 + $0xfc] sm:$0xf]
    %v125 = vld [vmem:[#allocation2 + $0x100] sm:$0xf]
    %v126 = vld [vmem:[#allocation2 + $0x104] sm:$0xf]
    %v127 = vld [vmem:[#allocation2 + $0x108] sm:$0xf]
    %v128 = vld [vmem:[#allocation2 + $0x10c] sm:$0xf]
    %v129 = vld [vmem:[#allocation2 + $0x110] sm:$0xf]
    %v130 = vld [vmem:[#allocation2 + $0x114] sm:$0xf]
    %v131 = vld [vmem:[#allocation2 + $0x118] sm:$0xf]
    %v132 = vld [vmem:[#allocation2 + $0x11c] sm:$0xf]
    %v133 = vld [vmem:[#allocation2 + $0x120] sm:$0xf]
    %v134 = vld [vmem:[#allocation2 + $0x124] sm:$0xf]
    %v135 = vld [vmem:[#allocation2 + $0x128] sm:$0xf]
    %v136 = vld [vmem:[#allocation2 + $0x12c] sm:$0xf]
    %v137 = vld [vmem:[#allocation2 + $0x130] sm:$0xf]
    %v138 = vld [vmem:[#allocation2 + $0x134] sm:$0xf]
    %v139 = vld [vmem:[#allocation2 + $0x138] sm:$0xf]
    %v140 = vld [vmem:[#allocation2 + $0x13c] sm:$0xf]
    %v141 = vld [vmem:[#allocation2 + $0x140] sm:$0xf]
    %v142 = vld [vmem:[#allocation2 + $0x144] sm:$0xf]
    %v143 = vld [vmem:[#allocation2 + $0x148] sm:$0xf]
    %v144 = vld [vmem:[#allocation2 + $0x14c] sm:$0xf]
    %v145 = vld [vmem:[#allocation2 + $0x150] sm:$0xf]
    %v146 = vld [vmem:[#allocation2 + $0x154] sm:$0xf]
    %v147 = vld [vmem:[#allocation2 + $0x158] sm:$0xf]
    %v148 = vld [vmem:[#allocation2 + $0x15c] sm:$0xf]
    %v149 = vld [vmem:[#allocation2 + $0x160] sm:$0xf]
    %v150 = vld [vmem:[#allocation2 + $0x164] sm:$0xf]
    %v151 = vld [vmem:[#allocation2 + $0x168] sm:$0xf]
    %v152 = vld [vmem:[#allocation2 + $0x16c] sm:$0xf]
    %v153 = vld [vmem:[#allocation2 + $0x170] sm:$0xf]
    %v154 = vld [vmem:[#allocation2 + $0x174] sm:$0xf]
    %v155 = vld [vmem:[#allocation2 + $0x178] sm:$0xf]
    %v156 = vld [vmem:[#allocation2 + $0x17c] sm:$0xf]
    %v157 = vld [vmem:[#allocation2 + $0x180] sm:$0xf]
    %v158 = vld [vmem:[#allocation2 + $0x184] sm:$0xf]
    %v159 = vld [vmem:[#allocation2 + $0x188] sm:$0xf]
    %v160 = vld [vmem:[#allocation2 + $0x18c] sm:$0xf]
    %v161 = vld [vmem:[#allocation2 + $0x190] sm:$0xf]
    %v162 = vld [vmem:[#allocation2 + $0x194] sm:$0xf]
    %v163 = vld [vmem:[#allocation2 + $0x198] sm:$0xf]
    %v164 = vld [vmem:[#allocation2 + $0x19c] sm:$0xf]
    %v165 = vld [vmem:[#allocation2 + $0x1a0] sm:$0xf]
    %v166 = vld [vmem:[#allocation2 + $0x1a4] sm:$0xf]
    %v167 = vld [vmem:[#allocation2 + $0x1a8] sm:$0xf]
    %v168 = vld [vmem:[#allocation2 + $0x1ac] sm:$0xf]
    %v169 = vld [vmem:[#allocation2 + $0x1b0] sm:$0xf]
    %v170 = vld [vmem:[#allocation2 + $0x1b4] sm:$0xf]
    %v171 = vld [vmem:[#allocation2 + $0x1b8] sm:$0xf]
    %v172 = vld [vmem:[#allocation2 + $0x1bc] sm:$0xf]
    %v173 = vld [vmem:[#allocation2 + $0x1c0] sm:$0xf]
    %v174 = vld [vmem:[#allocation2 + $0x1c4] sm:$0xf]
    %v175 = vld [vmem:[#allocation2 + $0x1c8] sm:$0xf]
    %v176 = vld [vmem:[#allocation2 + $0x1cc] sm:$0xf]
    %v177 = vld [vmem:[#allocation2 + $0x1d0] sm:$0xf]
    %v178 = vld [vmem:[#allocation2 + $0x1d4] sm:$0xf]
    %v179 = vld [vmem:[#allocation2 + $0x1d8] sm:$0xf]
    %v180 = vld [vmem:[#allocation2 + $0x1dc] sm:$0xf]
    %v181 = vld [vmem:[#allocation2 + $0x1e0] sm:$0xf]
    %v182 = vld [vmem:[#allocation2 + $0x1e4] sm:$0xf]
    %v183 = vld [vmem:[#allocation2 + $0x1e8] sm:$0xf]
    %v184 = vld [vmem:[#allocation2 + $0x1ec] sm:$0xf]
    %v185 = vld [vmem:[#allocation2 + $0x1f0] sm:$0xf]
    %v186 = vld [vmem:[#allocation2 + $0x1f4] sm:$0xf]
    %v187 = vld [vmem:[#allocation2 + $0x1f8] sm:$0xf]
    %v188 = vld [vmem:[#allocation2 + $0x1fc] sm:$0xf]
    %v189 = vld [vmem:[%s2] sm:$0x1]
    %v191 = vlaneseq
    %v192 = vshrl.u32 %v191, 7
    %v193 = vsub.s32 0, %v192
    %v194 = vrot.slane %v189, %v193
    %v200 = vunpack.c.l.b16 %v57
    %v201 = vunpack.c.h.b16 %v57
    %v202 = vunpack.c.l.b16 %v58
    %v203 = vunpack.c.h.b16 %v58
    %v204 = vunpack.c.l.b16 %v59
    %v205 = vunpack.c.h.b16 %v59
    %v206 = vunpack.c.l.b16 %v60
    %v207 = vunpack.c.h.b16 %v60
    %v208 = vpack.c.b16 %v200, %v200
    %v209 = vpack.c.b16 %v201, %v201
    %v210 = vpack.c.b16 %v202, %v202
    %v211 = vpack.c.b16 %v203, %v203
    %v212 = vpack.c.b16 %v204, %v204
    %v213 = vpack.c.b16 %v205, %v205
    %v214 = vpack.c.b16 %v206, %v206
    %v215 = vpack.c.b16 %v207, %v207
    %v352 = vunpack.c.l.b16 %v61
    %v353 = vunpack.c.l.b16 %v62
    %v354 = vunpack.c.l.b16 %v63
    %v355 = vunpack.c.l.b16 %v64
    %v356 = vunpack.c.l.b16 %v65
    %v357 = vunpack.c.l.b16 %v66
    %v358 = vunpack.c.l.b16 %v67
    %v359 = vunpack.c.l.b16 %v68
    %v360 = vunpack.c.l.b16 %v69
    %v361 = vunpack.c.l.b16 %v70
    %v362 = vunpack.c.l.b16 %v71
    %v363 = vunpack.c.l.b16 %v72
    %v364 = vunpack.c.l.b16 %v73
    %v365 = vunpack.c.l.b16 %v74
    %v366 = vunpack.c.l.b16 %v75
    %v367 = vunpack.c.l.b16 %v76
    %v368 = vunpack.c.l.b16 %v77
    %v369 = vunpack.c.l.b16 %v78
    %v370 = vunpack.c.l.b16 %v79
    %v371 = vunpack.c.l.b16 %v80
    %v372 = vunpack.c.l.b16 %v81
    %v373 = vunpack.c.l.b16 %v82
    %v374 = vunpack.c.l.b16 %v83
    %v375 = vunpack.c.l.b16 %v84
    %v376 = vunpack.c.l.b16 %v85
    %v377 = vunpack.c.l.b16 %v86
    %v378 = vunpack.c.l.b16 %v87
    %v379 = vunpack.c.l.b16 %v88
    %v380 = vunpack.c.l.b16 %v89
    %v381 = vunpack.c.l.b16 %v90
    %v382 = vunpack.c.l.b16 %v91
    %v383 = vunpack.c.l.b16 %v92
    %v384 = vunpack.c.l.b16 %v93
    %v385 = vunpack.c.l.b16 %v94
    %v386 = vunpack.c.l.b16 %v95
    %v387 = vunpack.c.l.b16 %v96
    %v388 = vunpack.c.l.b16 %v97
    %v389 = vunpack.c.l.b16 %v98
    %v390 = vunpack.c.l.b16 %v99
    %v391 = vunpack.c.l.b16 %v100
    %v392 = vunpack.c.l.b16 %v101
    %v393 = vunpack.c.l.b16 %v102
    %v394 = vunpack.c.l.b16 %v103
    %v395 = vunpack.c.l.b16 %v104
    %v396 = vunpack.c.l.b16 %v105
    %v397 = vunpack.c.l.b16 %v106
    %v398 = vunpack.c.l.b16 %v107
    %v399 = vunpack.c.l.b16 %v108
    %v400 = vunpack.c.l.b16 %v109
    %v401 = vunpack.c.l.b16 %v110
    %v402 = vunpack.c.l.b16 %v111
    %v403 = vunpack.c.l.b16 %v112
    %v404 = vunpack.c.l.b16 %v113
    %v405 = vunpack.c.l.b16 %v114
    %v406 = vunpack.c.l.b16 %v115
    %v407 = vunpack.c.l.b16 %v116
    %v408 = vunpack.c.l.b16 %v117
    %v409 = vunpack.c.l.b16 %v118
    %v410 = vunpack.c.l.b16 %v119
    %v411 = vunpack.c.l.b16 %v120
    %v412 = vunpack.c.l.b16 %v121
    %v413 = vunpack.c.l.b16 %v122
    %v414 = vunpack.c.l.b16 %v123
    %v415 = vunpack.c.l.b16 %v124
    %v416 = vunpack.c.l.b16 %v125
    %v417 = vunpack.c.l.b16 %v126
    %v418 = vunpack.c.l.b16 %v127
    %v419 = vunpack.c.l.b16 %v128
    %v420 = vunpack.c.l.b16 %v129
    %v421 = vunpack.c.l.b16 %v130
    %v422 = vunpack.c.l.b16 %v131
    %v423 = vunpack.c.l.b16 %v132
    %v424 = vunpack.c.l.b16 %v133
    %v425 = vunpack.c.l.b16 %v134
    %v426 = vunpack.c.l.b16 %v135
    %v427 = vunpack.c.l.b16 %v136
    %v428 = vunpack.c.l.b16 %v137
    %v429 = vunpack.c.l.b16 %v138
    %v430 = vunpack.c.l.b16 %v139
    %v431 = vunpack.c.l.b16 %v140
    %v432 = vunpack.c.l.b16 %v141
    %v433 = vunpack.c.l.b16 %v142
    %v434 = vunpack.c.l.b16 %v143
    %v435 = vunpack.c.l.b16 %v144
    %v436 = vunpack.c.l.b16 %v145
    %v437 = vunpack.c.l.b16 %v146
    %v438 = vunpack.c.l.b16 %v147
    %v439 = vunpack.c.l.b16 %v148
    %v440 = vunpack.c.l.b16 %v149
    %v441 = vunpack.c.l.b16 %v150
    %v442 = vunpack.c.l.b16 %v151
    %v443 = vunpack.c.l.b16 %v152
    %v444 = vunpack.c.l.b16 %v153
    %v445 = vunpack.c.l.b16 %v154
    %v446 = vunpack.c.l.b16 %v155
    %v447 = vunpack.c.l.b16 %v156
    %v448 = vunpack.c.l.b16 %v157
    %v449 = vunpack.c.l.b16 %v158
    %v450 = vunpack.c.l.b16 %v159
    %v451 = vunpack.c.l.b16 %v160
    %v452 = vunpack.c.l.b16 %v161
    %v453 = vunpack.c.l.b16 %v162
    %v454 = vunpack.c.l.b16 %v163
    %v455 = vunpack.c.l.b16 %v164
    %v456 = vunpack.c.l.b16 %v165
    %v457 = vunpack.c.l.b16 %v166
    %v458 = vunpack.c.l.b16 %v167
    %v459 = vunpack.c.l.b16 %v168
    %v460 = vunpack.c.l.b16 %v169
    %v461 = vunpack.c.l.b16 %v170
    %v462 = vunpack.c.l.b16 %v171
    %v463 = vunpack.c.l.b16 %v172
    %v464 = vunpack.c.l.b16 %v173
    %v465 = vunpack.c.l.b16 %v174
    %v466 = vunpack.c.l.b16 %v175
    %v467 = vunpack.c.l.b16 %v176
    %v468 = vunpack.c.l.b16 %v177
    %v469 = vunpack.c.l.b16 %v178
    %v470 = vunpack.c.l.b16 %v179
    %v471 = vunpack.c.l.b16 %v180
    %v472 = vunpack.c.l.b16 %v181
    %v473 = vunpack.c.l.b16 %v182
    %v474 = vunpack.c.l.b16 %v183
    %v475 = vunpack.c.l.b16 %v184
    %v476 = vunpack.c.l.b16 %v185
    %v477 = vunpack.c.l.b16 %v186
    %v478 = vunpack.c.l.b16 %v187
    %v479 = vunpack.c.l.b16 %v188
    %v480 = vpack.c.b16 %v353, %v352
    %v481 = vpack.c.b16 %v355, %v354
    %v482 = vpack.c.b16 %v357, %v356
    %v483 = vpack.c.b16 %v359, %v358
    %v484 = vpack.c.b16 %v361, %v360
    %v485 = vpack.c.b16 %v363, %v362
    %v486 = vpack.c.b16 %v365, %v364
    %v487 = vpack.c.b16 %v367, %v366
    %v488 = vpack.c.b16 %v369, %v368
    %v489 = vpack.c.b16 %v371, %v370
    %v490 = vpack.c.b16 %v373, %v372
    %v491 = vpack.c.b16 %v375, %v374
    %v492 = vpack.c.b16 %v377, %v376
    %v493 = vpack.c.b16 %v379, %v378
    %v494 = vpack.c.b16 %v381, %v380
    %v495 = vpack.c.b16 %v383, %v382
    %v496 = vpack.c.b16 %v385, %v384
    %v497 = vpack.c.b16 %v387, %v386
    %v498 = vpack.c.b16 %v389, %v388
    %v499 = vpack.c.b16 %v391, %v390
    %v500 = vpack.c.b16 %v393, %v392
    %v501 = vpack.c.b16 %v395, %v394
    %v502 = vpack.c.b16 %v397, %v396
    %v503 = vpack.c.b16 %v399, %v398
    %v504 = vpack.c.b16 %v401, %v400
    %v505 = vpack.c.b16 %v403, %v402
    %v506 = vpack.c.b16 %v405, %v404
    %v507 = vpack.c.b16 %v407, %v406
    %v508 = vpack.c.b16 %v409, %v408
    %v509 = vpack.c.b16 %v411, %v410
    %v510 = vpack.c.b16 %v413, %v412
    %v511 = vpack.c.b16 %v415, %v414
    %v512 = vpack.c.b16 %v417, %v416
    %v513 = vpack.c.b16 %v419, %v418
    %v514 = vpack.c.b16 %v421, %v420
    %v515 = vpack.c.b16 %v423, %v422
    %v516 = vpack.c.b16 %v425, %v424
    %v517 = vpack.c.b16 %v427, %v426
    %v518 = vpack.c.b16 %v429, %v428
    %v519 = vpack.c.b16 %v431, %v430
    %v520 = vpack.c.b16 %v433, %v432
    %v521 = vpack.c.b16 %v435, %v434
    %v522 = vpack.c.b16 %v437, %v436
    %v523 = vpack.c.b16 %v439, %v438
    %v524 = vpack.c.b16 %v441, %v440
    %v525 = vpack.c.b16 %v443, %v442
    %v526 = vpack.c.b16 %v445, %v444
    %v527 = vpack.c.b16 %v447, %v446
    %v528 = vpack.c.b16 %v449, %v448
    %v529 = vpack.c.b16 %v451, %v450
    %v530 = vpack.c.b16 %v453, %v452
    %v531 = vpack.c.b16 %v455, %v454
    %v532 = vpack.c.b16 %v457, %v456
    %v533 = vpack.c.b16 %v459, %v458
    %v534 = vpack.c.b16 %v461, %v460
    %v535 = vpack.c.b16 %v463, %v462
    %v536 = vpack.c.b16 %v465, %v464
    %v537 = vpack.c.b16 %v467, %v466
    %v538 = vpack.c.b16 %v469, %v468
    %v539 = vpack.c.b16 %v471, %v470
    %v540 = vpack.c.b16 %v473, %v472
    %v541 = vpack.c.b16 %v475, %v474
    %v542 = vpack.c.b16 %v477, %v476
    %v543 = vpack.c.b16 %v479, %v478
    %608 = vmatprep.subr.bf16.mxu0 0
    %609 = vmatpush1.bf16.msra.mxu0 %v480
    %610 = vmatprep.subr.bf16.mxu0 0
    %611 = vmatpush1.bf16.msra.mxu0 %v481
    %612 = vmatprep.subr.bf16.mxu0 0
    %613 = vmatpush1.bf16.msra.mxu0 %v482
    %614 = vmatprep.subr.bf16.mxu0 0
    %615 = vmatpush1.bf16.msra.mxu0 %v483
    %616 = vmatprep.subr.bf16.mxu0 0
    %617 = vmatpush1.bf16.msra.mxu0 %v484
    %618 = vmatprep.subr.bf16.mxu0 0
    %619 = vmatpush1.bf16.msra.mxu0 %v485
    %620 = vmatprep.subr.bf16.mxu0 0
    %621 = vmatpush1.bf16.msra.mxu0 %v486
    %622 = vmatprep.subr.bf16.mxu0 0
    %623 = vmatpush1.bf16.msra.mxu0 %v487
    %624 = vmatprep.subr.bf16.mxu0 0
    %625 = vmatpush1.bf16.msra.mxu0 %v488
    %626 = vmatprep.subr.bf16.mxu0 0
    %627 = vmatpush1.bf16.msra.mxu0 %v489
    %628 = vmatprep.subr.bf16.mxu0 0
    %629 = vmatpush1.bf16.msra.mxu0 %v490
    %630 = vmatprep.subr.bf16.mxu0 0
    %631 = vmatpush1.bf16.msra.mxu0 %v491
    %632 = vmatprep.subr.bf16.mxu0 0
    %633 = vmatpush1.bf16.msra.mxu0 %v492
    %634 = vmatprep.subr.bf16.mxu0 0
    %635 = vmatpush1.bf16.msra.mxu0 %v493
    %636 = vmatprep.subr.bf16.mxu0 0
    %637 = vmatpush1.bf16.msra.mxu0 %v494
    %638 = vmatprep.subr.bf16.mxu0 0
    %639 = vmatpush1.bf16.msra.mxu0 %v495
    %640 = vmatprep.mubr.bf16.mxu0 %v209
    %641 = vmatmul.mubr.bf16.gmra.mrb[0].mxu0 %v208
    %v642 = vpop.f32.mrb[0].mxu0
    %v643 = vadd.f32 %v194, %v642
    %v644 = vpop.f32.mrb[0].mxu0
    %v645 = vpop.f32.mrb[0].mxu0
    %v646 = vpop.f32.mrb[0].mxu0
    %647 = vdwg.mxu0
    %648 = vmatprep.subr.bf16.mxu0 0
    %649 = vmatpush1.bf16.msra.mxu0 %v496
    %650 = vmatprep.subr.bf16.mxu0 0
    %651 = vmatpush1.bf16.msra.mxu0 %v497
    %652 = vmatprep.subr.bf16.mxu0 0
    %653 = vmatpush1.bf16.msra.mxu0 %v498
    %654 = vmatprep.subr.bf16.mxu0 0
    %655 = vmatpush1.bf16.msra.mxu0 %v499
    %656 = vmatprep.subr.bf16.mxu0 0
    %657 = vmatpush1.bf16.msra.mxu0 %v500
    %658 = vmatprep.subr.bf16.mxu0 0
    %659 = vmatpush1.bf16.msra.mxu0 %v501
    %660 = vmatprep.subr.bf16.mxu0 0
    %661 = vmatpush1.bf16.msra.mxu0 %v502
    %662 = vmatprep.subr.bf16.mxu0 0
    %663 = vmatpush1.bf16.msra.mxu0 %v503
    %664 = vmatprep.subr.bf16.mxu0 0
    %665 = vmatpush1.bf16.msra.mxu0 %v504
    %666 = vmatprep.subr.bf16.mxu0 0
    %667 = vmatpush1.bf16.msra.mxu0 %v505
    %668 = vmatprep.subr.bf16.mxu0 0
    %669 = vmatpush1.bf16.msra.mxu0 %v506
    %670 = vmatprep.subr.bf16.mxu0 0
    %671 = vmatpush1.bf16.msra.mxu0 %v507
    %672 = vmatprep.subr.bf16.mxu0 0
    %673 = vmatpush1.bf16.msra.mxu0 %v508
    %674 = vmatprep.subr.bf16.mxu0 0
    %675 = vmatpush1.bf16.msra.mxu0 %v509
    %676 = vmatprep.subr.bf16.mxu0 0
    %677 = vmatpush1.bf16.msra.mxu0 %v510
    %678 = vmatprep.subr.bf16.mxu0 0
    %679 = vmatpush1.bf16.msra.mxu0 %v511
    %680 = vmatprep.mubr.bf16.mxu0 %v211
    %681 = vmatmul.mubr.bf16.gmra.mrb[0].mxu0 %v210
    %v682 = vpop.f32.mrb[0].mxu0
    %v683 = vadd.f32 %v643, %v682
    %v684 = vpop.f32.mrb[0].mxu0
    %v685 = vpop.f32.mrb[0].mxu0
    %v686 = vpop.f32.mrb[0].mxu0
    %687 = vdwg.mxu0
    %688 = vmatprep.subr.bf16.mxu0 0
    %689 = vmatpush1.bf16.msra.mxu0 %v512
    %690 = vmatprep.subr.bf16.mxu0 0
    %691 = vmatpush1.bf16.msra.mxu0 %v513
    %692 = vmatprep.subr.bf16.mxu0 0
    %693 = vmatpush1.bf16.msra.mxu0 %v514
    %694 = vmatprep.subr.bf16.mxu0 0
    %695 = vmatpush1.bf16.msra.mxu0 %v515
    %696 = vmatprep.subr.bf16.mxu0 0
    %697 = vmatpush1.bf16.msra.mxu0 %v516
    %698 = vmatprep.subr.bf16.mxu0 0
    %699 = vmatpush1.bf16.msra.mxu0 %v517
    %700 = vmatprep.subr.bf16.mxu0 0
    %701 = vmatpush1.bf16.msra.mxu0 %v518
    %702 = vmatprep.subr.bf16.mxu0 0
    %703 = vmatpush1.bf16.msra.mxu0 %v519
    %704 = vmatprep.subr.bf16.mxu0 0
    %705 = vmatpush1.bf16.msra.mxu0 %v520
    %706 = vmatprep.subr.bf16.mxu0 0
    %707 = vmatpush1.bf16.msra.mxu0 %v521
    %708 = vmatprep.subr.bf16.mxu0 0
    %709 = vmatpush1.bf16.msra.mxu0 %v522
    %710 = vmatprep.subr.bf16.mxu0 0
    %711 = vmatpush1.bf16.msra.mxu0 %v523
    %712 = vmatprep.subr.bf16.mxu0 0
    %713 = vmatpush1.bf16.msra.mxu0 %v524
    %714 = vmatprep.subr.bf16.mxu0 0
    %715 = vmatpush1.bf16.msra.mxu0 %v525
    %716 = vmatprep.subr.bf16.mxu0 0
    %717 = vmatpush1.bf16.msra.mxu0 %v526
    %718 = vmatprep.subr.bf16.mxu0 0
    %719 = vmatpush1.bf16.msra.mxu0 %v527
    %720 = vmatprep.mubr.bf16.mxu0 %v213
    %721 = vmatmul.mubr.bf16.gmra.mrb[0].mxu0 %v212
    %v722 = vpop.f32.mrb[0].mxu0
    %v723 = vadd.f32 %v683, %v722
    %v724 = vpop.f32.mrb[0].mxu0
    %v725 = vpop.f32.mrb[0].mxu0
    %v726 = vpop.f32.mrb[0].mxu0
    %727 = vdwg.mxu0
    %728 = vmatprep.subr.bf16.mxu0 0
    %729 = vmatpush1.bf16.msra.mxu0 %v528
    %730 = vmatprep.subr.bf16.mxu0 0
    %731 = vmatpush1.bf16.msra.mxu0 %v529
    %732 = vmatprep.subr.bf16.mxu0 0
    %733 = vmatpush1.bf16.msra.mxu0 %v530
    %734 = vmatprep.subr.bf16.mxu0 0
    %735 = vmatpush1.bf16.msra.mxu0 %v531
    %736 = vmatprep.subr.bf16.mxu0 0
    %737 = vmatpush1.bf16.msra.mxu0 %v532
    %738 = vmatprep.subr.bf16.mxu0 0
    %739 = vmatpush1.bf16.msra.mxu0 %v533
    %740 = vmatprep.subr.bf16.mxu0 0
    %741 = vmatpush1.bf16.msra.mxu0 %v534
    %742 = vmatprep.subr.bf16.mxu0 0
    %743 = vmatpush1.bf16.msra.mxu0 %v535
    %744 = vmatprep.subr.bf16.mxu0 0
    %745 = vmatpush1.bf16.msra.mxu0 %v536
    %746 = vmatprep.subr.bf16.mxu0 0
    %747 = vmatpush1.bf16.msra.mxu0 %v537
    %748 = vmatprep.subr.bf16.mxu0 0
    %749 = vmatpush1.bf16.msra.mxu0 %v538
    %750 = vmatprep.subr.bf16.mxu0 0
    %751 = vmatpush1.bf16.msra.mxu0 %v539
    %752 = vmatprep.subr.bf16.mxu0 0
    %753 = vmatpush1.bf16.msra.mxu0 %v540
    %754 = vmatprep.subr.bf16.mxu0 0
    %755 = vmatpush1.bf16.msra.mxu0 %v541
    %756 = vmatprep.subr.bf16.mxu0 0
    %757 = vmatpush1.bf16.msra.mxu0 %v542
    %758 = vmatprep.subr.bf16.mxu0 0
    %759 = vmatpush1.bf16.msra.mxu0 %v543
    %760 = vmatprep.mubr.bf16.mxu0 %v215
    %761 = vmatmul.mubr.bf16.gmra.mrb[0].mxu0 %v214
    %v762 = vpop.f32.mrb[0].mxu0
    %v763 = vadd.f32 %v723, %v762
    %v764 = vpop.f32.mrb[0].mxu0
    %v765 = vpop.f32.mrb[0].mxu0
    %v766 = vpop.f32.mrb[0].mxu0
    %767 = vdwg.mxu0
    %v768 = vmax.f32 %v763, 0.0
    %v769 = vpack.c.bf16 %v768, %v768
    %v770 = vld [vmem:[#allocation4] sm:$0xff]
    %v771 = vld [vmem:[#allocation4 + $0x8] sm:$0xff]
    %v772 = vld [vmem:[#allocation4 + $0x10] sm:$0xff]
    %v773 = vld [vmem:[#allocation4 + $0x18] sm:$0xff]
    %v774 = vld [vmem:[#allocation4 + $0x20] sm:$0xff]
    %v775 = vld [vmem:[#allocation4 + $0x28] sm:$0xff]
    %v776 = vld [vmem:[#allocation4 + $0x30] sm:$0xff]
    %v777 = vld [vmem:[#allocation4 + $0x38] sm:$0xff]
    %v778 = vld [vmem:[#allocation4 + $0x40] sm:$0xff]
    %v779 = vld [vmem:[#allocation4 + $0x48] sm:$0xff]
    %v780 = vld [vmem:[#allocation4 + $0x50] sm:$0xff]
    %v781 = vld [vmem:[#allocation4 + $0x58] sm:$0xff]
    %v782 = vld [vmem:[#allocation4 + $0x60] sm:$0xff]
    %v783 = vld [vmem:[#allocation4 + $0x68] sm:$0xff]
    %v784 = vld [vmem:[#allocation4 + $0x70] sm:$0xff]
    %v785 = vld [vmem:[#allocation4 + $0x78] sm:$0xff]
    %v786 = vld [vmem:[%s4] sm:$0x3]
    %v788 = vlaneseq
    %v789 = vshrl.u32 %v788, 7
    %v790 = vsub.s32 0, %v789
    %v791 = vrot.slane %v786, %v790
    %v792 = vlaneseq
    %v793 = vshrl.u32 %v792, 7
    %v794 = vsub.s32 1, %v793
    %v795 = vrot.slane %v786, %v794
    %v814 = vunpack.c.l.b16 %v770
    %v815 = vunpack.c.h.b16 %v770
    %v816 = vunpack.c.l.b16 %v771
    %v817 = vunpack.c.h.b16 %v771
    %v818 = vunpack.c.l.b16 %v772
    %v819 = vunpack.c.h.b16 %v772
    %v820 = vunpack.c.l.b16 %v773
    %v821 = vunpack.c.h.b16 %v773
    %v822 = vunpack.c.l.b16 %v774
    %v823 = vunpack.c.h.b16 %v774
    %v824 = vunpack.c.l.b16 %v775
    %v825 = vunpack.c.h.b16 %v775
    %v826 = vunpack.c.l.b16 %v776
    %v827 = vunpack.c.h.b16 %v776
    %v828 = vunpack.c.l.b16 %v777
    %v829 = vunpack.c.h.b16 %v777
    %v830 = vunpack.c.l.b16 %v778
    %v831 = vunpack.c.h.b16 %v778
    %v832 = vunpack.c.l.b16 %v779
    %v833 = vunpack.c.h.b16 %v779
    %v834 = vunpack.c.l.b16 %v780
    %v835 = vunpack.c.h.b16 %v780
    %v836 = vunpack.c.l.b16 %v781
    %v837 = vunpack.c.h.b16 %v781
    %v838 = vunpack.c.l.b16 %v782
    %v839 = vunpack.c.h.b16 %v782
    %v840 = vunpack.c.l.b16 %v783
    %v841 = vunpack.c.h.b16 %v783
    %v842 = vunpack.c.l.b16 %v784
    %v843 = vunpack.c.h.b16 %v784
    %v844 = vunpack.c.l.b16 %v785
    %v845 = vunpack.c.h.b16 %v785
    %v846 = vpack.c.b16 %v816, %v814
    %v847 = vpack.c.b16 %v817, %v815
    %v848 = vpack.c.b16 %v820, %v818
    %v849 = vpack.c.b16 %v821, %v819
    %v850 = vpack.c.b16 %v824, %v822
    %v851 = vpack.c.b16 %v825, %v823
    %v852 = vpack.c.b16 %v828, %v826
    %v853 = vpack.c.b16 %v829, %v827
    %v854 = vpack.c.b16 %v832, %v830
    %v855 = vpack.c.b16 %v833, %v831
    %v856 = vpack.c.b16 %v836, %v834
    %v857 = vpack.c.b16 %v837, %v835
    %v858 = vpack.c.b16 %v840, %v838
    %v859 = vpack.c.b16 %v841, %v839
    %v860 = vpack.c.b16 %v844, %v842
    %v861 = vpack.c.b16 %v845, %v843
    %878 = vmatprep.subr.bf16.mxu0 %v847
    %879 = vmatpush1.bf16.msra.mxu0 %v846
    %880 = vmatprep.subr.bf16.mxu0 %v849
    %881 = vmatpush1.bf16.msra.mxu0 %v848
    %882 = vmatprep.subr.bf16.mxu0 %v851
    %883 = vmatpush1.bf16.msra.mxu0 %v850
    %884 = vmatprep.subr.bf16.mxu0 %v853
    %885 = vmatpush1.bf16.msra.mxu0 %v852
    %886 = vmatprep.subr.bf16.mxu0 %v855
    %887 = vmatpush1.bf16.msra.mxu0 %v854
    %888 = vmatprep.subr.bf16.mxu0 %v857
    %889 = vmatpush1.bf16.msra.mxu0 %v856
    %890 = vmatprep.subr.bf16.mxu0 %v859
    %891 = vmatpush1.bf16.msra.mxu0 %v858
    %892 = vmatprep.subr.bf16.mxu0 %v861
    %893 = vmatpush1.bf16.msra.mxu0 %v860
    %894 = vmatprep.subr.bf16.mxu0 0
    %895 = vmatpush1.bf16.msra.mxu0 0
    %896 = vmatprep.subr.bf16.mxu0 0
    %897 = vmatpush1.bf16.msra.mxu0 0
    %898 = vmatprep.subr.bf16.mxu0 0
    %899 = vmatpush1.bf16.msra.mxu0 0
    %900 = vmatprep.subr.bf16.mxu0 0
    %901 = vmatpush1.bf16.msra.mxu0 0
    %902 = vmatprep.subr.bf16.mxu0 0
    %903 = vmatpush1.bf16.msra.mxu0 0
    %904 = vmatprep.subr.bf16.mxu0 0
    %905 = vmatpush1.bf16.msra.mxu0 0
    %906 = vmatprep.subr.bf16.mxu0 0
    %907 = vmatpush1.bf16.msra.mxu0 0
    %908 = vmatprep.subr.bf16.mxu0 0
    %909 = vmatpush1.bf16.msra.mxu0 0
    %910 = vmatprep.mubr.bf16.mxu0 0
    %911 = vmatmul.mubr.bf16.gmra.mrb[0].mxu0 %v769
    %v912 = vpop.f32.mrb[0].mxu0
    %v913 = vadd.f32 %v791, %v912
    %v914 = vpop.f32.mrb[0].mxu0
    %v915 = vadd.f32 %v795, %v914
    %v916 = vpop.f32.mrb[0].mxu0
    %v917 = vpop.f32.mrb[0].mxu0
    %918 = vdwg.mxu0
    %v919 = vmax.f32 %v913, 0.0
    %v920 = vmax.f32 %v915, 0.0
    %v921 = vpack.c.bf16 %v919, %v919
    %v922 = vpack.c.bf16 %v920, %v920
    %v923 = vld [vmem:[%s5] sm:$0xff]
    %v924 = vld [vmem:[%s5 + $0x8] sm:$0xff]
    %v925 = vld [vmem:[%s5 + $0x10] sm:$0xff]
    %v926 = vld [vmem:[%s5 + $0x18] sm:$0xff]
    %v927 = vld [vmem:[%s5 + $0x20] sm:$0xff]
    %v928 = vld [vmem:[%s5 + $0x28] sm:$0xff]
    %v929 = vld [vmem:[%s5 + $0x30] sm:$0xff]
    %v930 = vld [vmem:[%s5 + $0x38] sm:$0xff]
    %v931 = vld [vmem:[%s5 + $0x40] sm:$0xff]
    %v932 = vld [vmem:[%s5 + $0x48] sm:$0xff]
    %v933 = vld [vmem:[%s5 + $0x50] sm:$0xff]
    %v934 = vld [vmem:[%s5 + $0x58] sm:$0xff]
    %v935 = vld [vmem:[%s5 + $0x60] sm:$0xff]
    %v936 = vld [vmem:[%s5 + $0x68] sm:$0xff]
    %v937 = vld [vmem:[%s5 + $0x70] sm:$0xff]
    %v938 = vld [vmem:[%s5 + $0x78] sm:$0xff]
    %v939 = vld [vmem:[%s5 + $0x80] sm:$0xff]
    %v940 = vld [vmem:[%s5 + $0x88] sm:$0xff]
    %v941 = vld [vmem:[%s5 + $0x90] sm:$0xff]
    %v942 = vld [vmem:[%s5 + $0x98] sm:$0xff]
    %v943 = vld [vmem:[%s5 + $0xa0] sm:$0xff]
    %v944 = vld [vmem:[%s5 + $0xa8] sm:$0xff]
    %v945 = vld [vmem:[%s5 + $0xb0] sm:$0xff]
    %v946 = vld [vmem:[%s5 + $0xb8] sm:$0xff]
    %v947 = vld [vmem:[%s5 + $0xc0] sm:$0xff]
    %v948 = vld [vmem:[%s5 + $0xc8] sm:$0xff]
    %v949 = vld [vmem:[%s5 + $0xd0] sm:$0xff]
    %v950 = vld [vmem:[%s5 + $0xd8] sm:$0xff]
    %v951 = vld [vmem:[%s5 + $0xe0] sm:$0xff]
    %v952 = vld [vmem:[%s5 + $0xe8] sm:$0xff]
    %v953 = vld [vmem:[%s5 + $0xf0] sm:$0xff]
    %v954 = vld [vmem:[%s5 + $0xf8] sm:$0xff]
    %v955 = vld [vmem:[%s6] sm:$0x3]
    %v957 = vlaneseq
    %v958 = vshrl.u32 %v957, 7
    %v959 = vsub.s32 0, %v958
    %v960 = vrot.slane %v955, %v959
    %v961 = vlaneseq
    %v962 = vshrl.u32 %v961, 7
    %v963 = vsub.s32 1, %v962
    %v964 = vrot.slane %v955, %v963
    %v999 = vunpack.c.l.b16 %v923
    %v1000 = vunpack.c.h.b16 %v923
    %v1001 = vunpack.c.l.b16 %v924
    %v1002 = vunpack.c.h.b16 %v924
    %v1003 = vunpack.c.l.b16 %v925
    %v1004 = vunpack.c.h.b16 %v925
    %v1005 = vunpack.c.l.b16 %v926
    %v1006 = vunpack.c.h.b16 %v926
    %v1007 = vunpack.c.l.b16 %v927
    %v1008 = vunpack.c.h.b16 %v927
    %v1009 = vunpack.c.l.b16 %v928
    %v1010 = vunpack.c.h.b16 %v928
    %v1011 = vunpack.c.l.b16 %v929
    %v1012 = vunpack.c.h.b16 %v929
    %v1013 = vunpack.c.l.b16 %v930
    %v1014 = vunpack.c.h.b16 %v930
    %v1015 = vunpack.c.l.b16 %v931
    %v1016 = vunpack.c.h.b16 %v931
    %v1017 = vunpack.c.l.b16 %v932
    %v1018 = vunpack.c.h.b16 %v932
    %v1019 = vunpack.c.l.b16 %v933
    %v1020 = vunpack.c.h.b16 %v933
    %v1021 = vunpack.c.l.b16 %v934
    %v1022 = vunpack.c.h.b16 %v934
    %v1023 = vunpack.c.l.b16 %v935
    %v1024 = vunpack.c.h.b16 %v935
    %v1025 = vunpack.c.l.b16 %v936
    %v1026 = vunpack.c.h.b16 %v936
    %v1027 = vunpack.c.l.b16 %v937
    %v1028 = vunpack.c.h.b16 %v937
    %v1029 = vunpack.c.l.b16 %v938
    %v1030 = vunpack.c.h.b16 %v938
    %v1031 = vunpack.c.l.b16 %v939
    %v1032 = vunpack.c.h.b16 %v939
    %v1033 = vunpack.c.l.b16 %v940
    %v1034 = vunpack.c.h.b16 %v940
    %v1035 = vunpack.c.l.b16 %v941
    %v1036 = vunpack.c.h.b16 %v941
    %v1037 = vunpack.c.l.b16 %v942
    %v1038 = vunpack.c.h.b16 %v942
    %v1039 = vunpack.c.l.b16 %v943
    %v1040 = vunpack.c.h.b16 %v943
    %v1041 = vunpack.c.l.b16 %v944
    %v1042 = vunpack.c.h.b16 %v944
    %v1043 = vunpack.c.l.b16 %v945
    %v1044 = vunpack.c.h.b16 %v945
    %v1045 = vunpack.c.l.b16 %v946
    %v1046 = vunpack.c.h.b16 %v946
    %v1047 = vunpack.c.l.b16 %v947
    %v1048 = vunpack.c.h.b16 %v947
    %v1049 = vunpack.c.l.b16 %v948
    %v1050 = vunpack.c.h.b16 %v948
    %v1051 = vunpack.c.l.b16 %v949
    %v1052 = vunpack.c.h.b16 %v949
    %v1053 = vunpack.c.l.b16 %v950
    %v1054 = vunpack.c.h.b16 %v950
    %v1055 = vunpack.c.l.b16 %v951
    %v1056 = vunpack.c.h.b16 %v951
    %v1057 = vunpack.c.l.b16 %v952
    %v1058 = vunpack.c.h.b16 %v952
    %v1059 = vunpack.c.l.b16 %v953
    %v1060 = vunpack.c.h.b16 %v953
    %v1061 = vunpack.c.l.b16 %v954
    %v1062 = vunpack.c.h.b16 %v954
    %v1063 = vpack.c.b16 %v1001, %v999
    %v1064 = vpack.c.b16 %v1002, %v1000
    %v1065 = vpack.c.b16 %v1005, %v1003
    %v1066 = vpack.c.b16 %v1006, %v1004
    %v1067 = vpack.c.b16 %v1009, %v1007
    %v1068 = vpack.c.b16 %v1010, %v1008
    %v1069 = vpack.c.b16 %v1013, %v1011
    %v1070 = vpack.c.b16 %v1014, %v1012
    %v1071 = vpack.c.b16 %v1017, %v1015
    %v1072 = vpack.c.b16 %v1018, %v1016
    %v1073 = vpack.c.b16 %v1021, %v1019
    %v1074 = vpack.c.b16 %v1022, %v1020
    %v1075 = vpack.c.b16 %v1025, %v1023
    %v1076 = vpack.c.b16 %v1026, %v1024
    %v1077 = vpack.c.b16 %v1029, %v1027
    %v1078 = vpack.c.b16 %v1030, %v1028
    %v1079 = vpack.c.b16 %v1033, %v1031
    %v1080 = vpack.c.b16 %v1034, %v1032
    %v1081 = vpack.c.b16 %v1037, %v1035
    %v1082 = vpack.c.b16 %v1038, %v1036
    %v1083 = vpack.c.b16 %v1041, %v1039
    %v1084 = vpack.c.b16 %v1042, %v1040
    %v1085 = vpack.c.b16 %v1045, %v1043
    %v1086 = vpack.c.b16 %v1046, %v1044
    %v1087 = vpack.c.b16 %v1049, %v1047
    %v1088 = vpack.c.b16 %v1050, %v1048
    %v1089 = vpack.c.b16 %v1053, %v1051
    %v1090 = vpack.c.b16 %v1054, %v1052
    %v1091 = vpack.c.b16 %v1057, %v1055
    %v1092 = vpack.c.b16 %v1058, %v1056
    %v1093 = vpack.c.b16 %v1061, %v1059
    %v1094 = vpack.c.b16 %v1062, %v1060
    %1127 = vmatprep.subr.bf16.mxu0 %v1064
    %1128 = vmatpush1.bf16.msra.mxu0 %v1063
    %1129 = vmatprep.subr.bf16.mxu0 %v1066
    %1130 = vmatpush1.bf16.msra.mxu0 %v1065
    %1131 = vmatprep.subr.bf16.mxu0 %v1068
    %1132 = vmatpush1.bf16.msra.mxu0 %v1067
    %1133 = vmatprep.subr.bf16.mxu0 %v1070
    %1134 = vmatpush1.bf16.msra.mxu0 %v1069
    %1135 = vmatprep.subr.bf16.mxu0 %v1072
    %1136 = vmatpush1.bf16.msra.mxu0 %v1071
    %1137 = vmatprep.subr.bf16.mxu0 %v1074
    %1138 = vmatpush1.bf16.msra.mxu0 %v1073
    %1139 = vmatprep.subr.bf16.mxu0 %v1076
    %1140 = vmatpush1.bf16.msra.mxu0 %v1075
    %1141 = vmatprep.subr.bf16.mxu0 %v1078
    %1142 = vmatpush1.bf16.msra.mxu0 %v1077
    %1143 = vmatprep.subr.bf16.mxu0 %v1080
    %1144 = vmatpush1.bf16.msra.mxu0 %v1079
    %1145 = vmatprep.subr.bf16.mxu0 %v1082
    %1146 = vmatpush1.bf16.msra.mxu0 %v1081
    %1147 = vmatprep.subr.bf16.mxu0 %v1084
    %1148 = vmatpush1.bf16.msra.mxu0 %v1083
    %1149 = vmatprep.subr.bf16.mxu0 %v1086
    %1150 = vmatpush1.bf16.msra.mxu0 %v1085
    %1151 = vmatprep.subr.bf16.mxu0 %v1088
    %1152 = vmatpush1.bf16.msra.mxu0 %v1087
    %1153 = vmatprep.subr.bf16.mxu0 %v1090
    %1154 = vmatpush1.bf16.msra.mxu0 %v1089
    %1155 = vmatprep.subr.bf16.mxu0 %v1092
    %1156 = vmatpush1.bf16.msra.mxu0 %v1091
    %1157 = vmatprep.subr.bf16.mxu0 %v1094
    %1158 = vmatpush1.bf16.msra.mxu0 %v1093
    %1159 = vmatprep.mubr.bf16.mxu0 %v922
    %1160 = vmatmul.mubr.bf16.gmra.mrb[0].mxu0 %v921
    %v1161 = vpop.f32.mrb[0].mxu0
    %v1162 = vadd.f32 %v960, %v1161
    %v1163 = vpop.f32.mrb[0].mxu0
    %v1164 = vadd.f32 %v964, %v1163
    %v1165 = vpop.f32.mrb[0].mxu0
    %v1166 = vpop.f32.mrb[0].mxu0
    %1167 = vdwg.mxu0
    %v1168 = vmul.f32 %v1162, %v1162
    %1169 = vadd.xlane.f32.xlu0 %v1168
    %v1170 = vpop.xlane.xlu0 %1169
    %v1171 = vmax.f32 %v1170, 1e-24
    %v1172 = vrsqrt.pop %v1171
    %v1173 = vmul.f32 %v1162, %v1172
    %1174 = vst [vmem:[%s7] sm:$0xff] %v1173
    %1175 = vst [vmem:[%s8] sm:$0xff] %v1164
    // Predicated region
    $region38: #{multihead_forward.1} parent=1 // pred_check
      _
    $region39: #{multihead_forward.1} parent=1 // pred_check_branch
      %1177 = sbr.rel (0) target = $region41
    $region40: #{multihead_forward.1} parent=1 // pred_region
      _
    $region41: #{multihead_forward.1} parent=1 // pred_fallthru
      _
    // Predicated region
    $region42: #{multihead_forward.1} parent=1 // pred_check
      _
    $region43: #{multihead_forward.1} parent=1 // pred_check_branch
      %1179 = sbr.rel (0) target = $region45
    $region44: #{multihead_forward.1} parent=1 // pred_region
      _
    $region45: #{multihead_forward.1} parent=1 // pred_fallthru
      _
    // Predicated region
    $region46: #{multihead_forward.1} parent=1 // pred_check
      _
    $region47: #{multihead_forward.1} parent=1 // pred_check_branch
      %1181 = sbr.rel (0) target = $region49
    $region48: #{multihead_forward.1} parent=1 // pred_region
      _
    $region49: #{multihead_forward.1} parent=1 // pred_fallthru
      _
    // Predicated region
    $region50: #{multihead_forward.1} parent=1 // pred_check
      _
    $region51: #{multihead_forward.1} parent=1 // pred_check_branch
      %1183 = sbr.rel (0) target = $region53
    $region52: #{multihead_forward.1} parent=1 // pred_region
      _
    $region53: #{multihead_forward.1} parent=1 // pred_fallthru
      _
    %1184 = vsyncpa [#allocation3], 1
    %1185 = vsyncpa [#allocation5], 1

</llo_original>
